<compile_context>
chip_gen: v7x
topology: tpu7x:2x2x1
jax: 0.10.0
libtpu: 0.0.40
codegen_flags: <defaults>
</compile_context>

<pallas_src>
import functools
import math

import jax
import jax.numpy as jnp
from jax.experimental import pallas as pl
from jax.experimental.pallas import tpu as pltpu

_LANE = 128          # TPU lane width; all narrow dims are padded to this.
_SUB = 8             # f32 sublanes per vreg; batch is padded to a multiple.
_HIDDEN_PAD = [256, 128, 128, 128, 128, 128]   # padded output width per layer


def _apply_act(h, act):
    # Static (trace-time) dispatch mirroring the PyTorch constructor choices.
    if act == "relu":
        return jnp.maximum(h, 0.0)
    if act == "leaky":
        return jnp.where(h >= 0.0, h, 0.01 * h)
    if act == "sigmoid":
        return jax.nn.sigmoid(h)
    if act == "tanh":
        return jnp.tanh(h)
    raise ValueError(f"unknown activation: {act}")


def _disc_kernel(x_ref, p256_ref, p128_ref, o_ref, *, act):
    """Fused predictor: 5 x (Linear + act) followed by the final Linear.

    p256_ref: (8 + features, 256)  rows 0:8  -> bias slab (row i = bias of layer i+1)
                                   rows 8:   -> W1 (features, 256)
    p128_ref: (768, 128)           rows   0:256 -> W2 (256,128)
                                   rows 256:384 -> W3 (padded 128,128)
                                   rows 384:512 -> W4 (padded 128,128)
                                   rows 512:640 -> W5 (padded 128,128)
                                   rows 640:768 -> W6 (padded 128,128)
    """
    bias = p256_ref[0:_SUB, :]                       # (8, 256), loaded once
    h = x_ref[...]                                   # (B, features)

    # Layer 1: features -> 256
    w1 = p256_ref[_SUB:, :]                          # (features, 256)
    h = _apply_act(
        jnp.dot(h, w1, preferred_element_type=jnp.float32) + bias[0:1, :], act)

    # Layer 2: 256 -> 128
    w2 = p128_ref[0:256, :]
    h = _apply_act(
        jnp.dot(h, w2, preferred_element_type=jnp.float32)
        + bias[1:2, :_LANE], act)

    # Layers 3..5: 128 -> 128 (true widths 64/32/16, zero-padded)
    for i in range(3):
        lo = 256 + i * _LANE
        w = p128_ref[lo:lo + _LANE, :]
        h = _apply_act(
            jnp.dot(h, w, preferred_element_type=jnp.float32)
            + bias[2 + i:3 + i, :_LANE], act)

    # Layer 6: 128 -> 128 (true 16 -> 1); unmasked lane-dense store.
    w6 = p128_ref[640:768, :]
    o_ref[...] = (
        jnp.dot(h, w6, preferred_element_type=jnp.float32)
        + bias[5:6, :_LANE])


def simple_disc_forward(packed, x, *, act="relu"):
    """Runs the fused Pallas kernel.  x: (batch, features) float32."""
    p256, p128 = packed
    batch, features = x.shape
    b_pad = max(_SUB, ((batch + _SUB - 1) // _SUB) * _SUB)
    if b_pad != batch:
        x = jnp.pad(x, ((0, b_pad - batch), (0, 0)))

    # Advisory cost estimate (padded dims) so XLA can schedule around us.
    mm_terms = features * 256 + 256 * 128 + 4 * 128 * 128
    flops = 2 * b_pad * mm_terms
    transcendentals = b_pad * sum(_HIDDEN_PAD[:5]) if act in ("sigmoid", "tanh") else 0
    bytes_accessed = 4 * (b_pad * features + p256.size + p128.size + b_pad * _LANE)

    vmem_spec = pl.BlockSpec(memory_space=pltpu.MemorySpace.VMEM)
    out = pl.pallas_call(
        functools.partial(_disc_kernel, act=act),
        out_shape=jax.ShapeDtypeStruct((b_pad, _LANE), jnp.float32),
        in_specs=[vmem_spec, vmem_spec, vmem_spec],
        out_specs=vmem_spec,
        cost_estimate=pl.CostEstimate(
            flops=flops,
            transcendentals=transcendentals,
            bytes_accessed=bytes_accessed),
    )(x, p256, p128)
    return out[:batch, :1]                 # (batch, 1), matching nn.Linear(16, 1)


# ----------------------------------------------------------------------------
# Parameter init (matches nn.Linear default: U(-1/sqrt(fan_in), 1/sqrt(fan_in)))
# and one-time packing into the two VMEM slabs consumed by the kernel.
# ----------------------------------------------------------------------------

def init_layers(key, features):
    dims = [features, 256, 128, 64, 32, 16, 1]
    layers = []
    for i in range(6):
        key, kw, kb = jax.random.split(key, 3)
        din, dout = dims[i], dims[i + 1]
        bound = 1.0 / math.sqrt(din)
        w = jax.random.uniform(kw, (din, dout), jnp.float32, -bound, bound)
        b = jax.random.uniform(kb, (dout,), jnp.float32, -bound, bound)
        layers.append((w, b))
    return layers


def pack_params(layers):
    """Packs 6 (w, b) pairs into (p256, p128) slabs with lane/sublane padding."""
    features = layers[0][0].shape[0]
    pad_in = [features, 256, 128, 128, 128, 128]

    # Bias slab: (8, 256); row i holds layer-(i+1) bias, zero-padded.
    bias_slab = jnp.zeros((_SUB, 256), jnp.float32)
    for i, (_, b) in enumerate(layers):
        bias_slab = bias_slab.at[i, :b.shape[0]].set(b)

    # 256-lane slab: bias block stacked on W1.
    p256 = jnp.concatenate([bias_slab, layers[0][0]], axis=0)   # (8+features, 256)

    # 128-lane slab: W2..W6, each zero-padded to (pad_in[i], 128).
    blocks = []
    for i in range(1, 6):
        w, _ = layers[i]
        din, dout = w.shape
        wp = jnp.zeros((pad_in[i], _LANE), jnp.float32).at[:din, :dout].set(w)
        blocks.append(wp)
    p128 = jnp.concatenate(blocks, axis=0)                       # (768, 128)
    return p256, p128


def reference_forward(layers, x, act="relu"):
    """Pure-JAX reference of the PyTorch forward, for correctness checking."""
    h = x
    for i, (w, b) in enumerate(layers):
        h = h @ w + b.reshape(1, -1)
        if i < 5:
            h = _apply_act(h, act)
    return h


# ----------------------------------------------------------------------------
# Main
# ----------------------------------------------------------------------------

if __name__ == "__main__":
    # simple_disc(act='relu', m_dim, vertexes, b_dim):
    #   features = vertexes * m_dim + vertexes * vertexes * b_dim
    act = "relu"
    vertexes, m_dim, b_dim = 8, 10, 5
    features = vertexes * m_dim + vertexes * vertexes * b_dim   # 400
    batch = 2

    key = jax.random.PRNGKey(0)
    kp, kx = jax.random.split(key)
    layers = init_layers(kp, features)
    packed = pack_params(layers)
    x = jax.random.normal(kx, (batch, features), jnp.float32)

    fwd = jax.jit(functools.partial(simple_disc_forward, act=act))
    pred = fwd(packed, x)
    jax.block_until_ready(pred)

    assert pred.shape == (batch, 1), pred.shape

    ref = reference_forward(layers, x, act=act)
    assert jnp.allclose(pred, ref, atol=1e-4, rtol=1e-4), (
        "mismatch vs. pure-JAX reference:\n"
        f"pallas={pred}\nref={ref}"
    )
    print("KERNEL_OK")
</pallas_src>

<mosaic_0001>
module attributes {stable_mosaic.version = 11 : i64} {
  func.func @_disc_kernel(%arg0: memref<8x400xf32, #tpu.memory_space<vmem>>, %arg1: memref<408x256xf32, #tpu.memory_space<vmem>>, %arg2: memref<768x128xf32, #tpu.memory_space<vmem>>, %arg3: memref<8x128xf32, #tpu.memory_space<vmem>>) attributes {dimension_semantics = [], scalar_prefetch = 0 : i64, scratch_operands = 0 : i64, tpu.core_type = #tpu.core_type<tc>} {
    %c0 = arith.constant 0 : index
    %c0_0 = arith.constant 0 : index
    %0 = vector.load %arg1[%c0, %c0_0] : memref<408x256xf32, #tpu.memory_space<vmem>>, vector<8x256xf32>
    %c0_1 = arith.constant 0 : index
    %c0_2 = arith.constant 0 : index
    %1 = vector.load %arg0[%c0_1, %c0_2] : memref<8x400xf32, #tpu.memory_space<vmem>>, vector<8x400xf32>
    %c8 = arith.constant 8 : index
    %c0_3 = arith.constant 0 : index
    %2 = vector.load %arg1[%c8, %c0_3] : memref<408x256xf32, #tpu.memory_space<vmem>>, vector<400x256xf32>
    %cst = arith.constant dense<0.000000e+00> : vector<8x256xf32>
    %3 = tpu.matmul %1, %2, %cst {dimension_numbers = #tpu.dot_dimension_numbers<[1], [0], [0], [1], [0, 0, 1, 1], [], []>} : vector<8x400xf32>, vector<400x256xf32>, vector<8x256xf32> -> vector<8x256xf32>
    %4 = vector.extract_strided_slice %0 {offsets = [0, 0], sizes = [1, 256], strides = [1, 1]} : vector<8x256xf32> to vector<1x256xf32>
    %5 = vector.broadcast %4 : vector<1x256xf32> to vector<8x256xf32>
    %6 = arith.addf %3, %5 : vector<8x256xf32>
    %cst_4 = arith.constant 0.000000e+00 : f32
    %7 = vector.broadcast %cst_4 : f32 to vector<8x256xf32>
    %8 = arith.maximumf %6, %7 : vector<8x256xf32>
    %c0_5 = arith.constant 0 : index
    %c0_6 = arith.constant 0 : index
    %9 = vector.load %arg2[%c0_5, %c0_6] : memref<768x128xf32, #tpu.memory_space<vmem>>, vector<256x128xf32>
    %cst_7 = arith.constant dense<0.000000e+00> : vector<8x128xf32>
    %10 = tpu.matmul %8, %9, %cst_7 {dimension_numbers = #tpu.dot_dimension_numbers<[1], [0], [0], [1], [0, 0, 1, 1], [], []>} : vector<8x256xf32>, vector<256x128xf32>, vector<8x128xf32> -> vector<8x128xf32>
    %11 = vector.extract_strided_slice %0 {offsets = [1, 0], sizes = [1, 128], strides = [1, 1]} : vector<8x256xf32> to vector<1x128xf32>
    %12 = vector.broadcast %11 : vector<1x128xf32> to vector<8x128xf32>
    %13 = arith.addf %10, %12 : vector<8x128xf32>
    %cst_8 = arith.constant 0.000000e+00 : f32
    %14 = vector.broadcast %cst_8 : f32 to vector<8x128xf32>
    %15 = arith.maximumf %13, %14 : vector<8x128xf32>
    %c256 = arith.constant 256 : index
    %c0_9 = arith.constant 0 : index
    %16 = vector.load %arg2[%c256, %c0_9] : memref<768x128xf32, #tpu.memory_space<vmem>>, vector<128x128xf32>
    %cst_10 = arith.constant dense<0.000000e+00> : vector<8x128xf32>
    %17 = tpu.matmul %15, %16, %cst_10 {dimension_numbers = #tpu.dot_dimension_numbers<[1], [0], [0], [1], [0, 0, 1, 1], [], []>} : vector<8x128xf32>, vector<128x128xf32>, vector<8x128xf32> -> vector<8x128xf32>
    %18 = vector.extract_strided_slice %0 {offsets = [2, 0], sizes = [1, 128], strides = [1, 1]} : vector<8x256xf32> to vector<1x128xf32>
    %19 = vector.broadcast %18 : vector<1x128xf32> to vector<8x128xf32>
    %20 = arith.addf %17, %19 : vector<8x128xf32>
    %cst_11 = arith.constant 0.000000e+00 : f32
    %21 = vector.broadcast %cst_11 : f32 to vector<8x128xf32>
    %22 = arith.maximumf %20, %21 : vector<8x128xf32>
    %c384 = arith.constant 384 : index
    %c0_12 = arith.constant 0 : index
    %23 = vector.load %arg2[%c384, %c0_12] : memref<768x128xf32, #tpu.memory_space<vmem>>, vector<128x128xf32>
    %cst_13 = arith.constant dense<0.000000e+00> : vector<8x128xf32>
    %24 = tpu.matmul %22, %23, %cst_13 {dimension_numbers = #tpu.dot_dimension_numbers<[1], [0], [0], [1], [0, 0, 1, 1], [], []>} : vector<8x128xf32>, vector<128x128xf32>, vector<8x128xf32> -> vector<8x128xf32>
    %25 = vector.extract_strided_slice %0 {offsets = [3, 0], sizes = [1, 128], strides = [1, 1]} : vector<8x256xf32> to vector<1x128xf32>
    %26 = vector.broadcast %25 : vector<1x128xf32> to vector<8x128xf32>
    %27 = arith.addf %24, %26 : vector<8x128xf32>
    %cst_14 = arith.constant 0.000000e+00 : f32
    %28 = vector.broadcast %cst_14 : f32 to vector<8x128xf32>
    %29 = arith.maximumf %27, %28 : vector<8x128xf32>
    %c512 = arith.constant 512 : index
    %c0_15 = arith.constant 0 : index
    %30 = vector.load %arg2[%c512, %c0_15] : memref<768x128xf32, #tpu.memory_space<vmem>>, vector<128x128xf32>
    %cst_16 = arith.constant dense<0.000000e+00> : vector<8x128xf32>
    %31 = tpu.matmul %29, %30, %cst_16 {dimension_numbers = #tpu.dot_dimension_numbers<[1], [0], [0], [1], [0, 0, 1, 1], [], []>} : vector<8x128xf32>, vector<128x128xf32>, vector<8x128xf32> -> vector<8x128xf32>
    %32 = vector.extract_strided_slice %0 {offsets = [4, 0], sizes = [1, 128], strides = [1, 1]} : vector<8x256xf32> to vector<1x128xf32>
    %33 = vector.broadcast %32 : vector<1x128xf32> to vector<8x128xf32>
    %34 = arith.addf %31, %33 : vector<8x128xf32>
    %cst_17 = arith.constant 0.000000e+00 : f32
    %35 = vector.broadcast %cst_17 : f32 to vector<8x128xf32>
    %36 = arith.maximumf %34, %35 : vector<8x128xf32>
    %c640 = arith.constant 640 : index
    %c0_18 = arith.constant 0 : index
    %37 = vector.load %arg2[%c640, %c0_18] : memref<768x128xf32, #tpu.memory_space<vmem>>, vector<128x128xf32>
    %cst_19 = arith.constant dense<0.000000e+00> : vector<8x128xf32>
    %38 = tpu.matmul %36, %37, %cst_19 {dimension_numbers = #tpu.dot_dimension_numbers<[1], [0], [0], [1], [0, 0, 1, 1], [], []>} : vector<8x128xf32>, vector<128x128xf32>, vector<8x128xf32> -> vector<8x128xf32>
    %39 = vector.extract_strided_slice %0 {offsets = [5, 0], sizes = [1, 128], strides = [1, 1]} : vector<8x256xf32> to vector<1x128xf32>
    %40 = vector.broadcast %39 : vector<1x128xf32> to vector<8x128xf32>
    %41 = arith.addf %38, %40 : vector<8x128xf32>
    %c0_20 = arith.constant 0 : index
    %c0_21 = arith.constant 0 : index
    %42 = vector.load %arg3[%c0_20, %c0_21] : memref<8x128xf32, #tpu.memory_space<vmem>>, vector<8x128xf32>
    tpu.vector_store %arg3[%c0_20, %c0_21], %41 {strides = array<i32>} : memref<8x128xf32, #tpu.memory_space<vmem>>, vector<8x128xf32>,
    return
  }
}

</mosaic_0001>

<llo_original>
// kernel: simple_disc_forward.1
$region0: #{simple_disc_forward.1}
  #allocation0 [shape = 'u32[]', space=smem, size = 0x4, offset = 0x4, fixed_abs, tag = 'smem constant byte address 0x4 - core index']
  #allocation1 [shape = 'u32[144,128]{1,0:T(1,128)}', space=vmem, size = 0x12000, scoped, tag = 'internal scratch']
  %s0 = inlined_call_operand.vmem [shape: f32[8,400], index: 0, kind: input, shape index: {}]
  %s1 = inlined_call_operand.hbm [shape: f32[408,256], index: 1, kind: input, shape index: {}]
  %s2 = inlined_call_operand.hbm [shape: f32[768,128], index: 2, kind: input, shape index: {}]
  %s3 = inlined_call_operand.vmem [shape: f32[8,128], index: 3, kind: output, shape index: {}]
  %s4 = sld [smem:[#allocation0]]
  $region30: #{simple_disc_forward.1} parent=0
    _
  %s6 = ssub.s32 1, %s4
  %s7 = scalar_select 0, %s6, %s4
  $region1: #{simple_disc_forward.1} parent=0
    #allocation2 [shape = 'u8[417792]{0}', space=vmem, size = 0x66000, scoped, tag = 'input window, operand 1, single buffered']
    #allocation3 [shape = 's32[1]{0}', space=sflag, size = 0x4, scoped, tag = 'scoped memory for simple_disc_forward.1']
    #allocation4 [shape = 'u8[393216]{0}', space=vmem, size = 0x60000, scoped, tag = 'input window, operand 2, single buffered']
    #allocation5 [shape = 's32[1]{0}', space=sflag, size = 0x4, scoped, tag = 'scoped memory for simple_disc_forward.1']
    %8 = vsyncpa [#allocation3], 0
    %9 = vsyncpa [#allocation5], 0
    // Predicated region
    $region2: #{simple_disc_forward.1} parent=1 // pred_check
      _
    $region3: #{simple_disc_forward.1} parent=1 // pred_check_branch
      %11 = sbr.rel (0) target = $region5
    $region4: #{simple_disc_forward.1} parent=1 // pred_region
      _
    $region5: #{simple_disc_forward.1} parent=1 // pred_fallthru
      _
    // Predicated region
    $region6: #{simple_disc_forward.1} parent=1 // pred_check
      _
    $region7: #{simple_disc_forward.1} parent=1 // pred_check_branch
      %13 = sbr.rel (0) target = $region9
    $region8: #{simple_disc_forward.1} parent=1 // pred_region
      %s15 = ssub.s32 13056, 13056
      %16 = vsyncadd [#allocation3], %s15
      %s17 = sshll.u32 [#allocation2], 4
      %s18 = int_to_ptr.vmem [resolvable:$true] %s17
      %23 = dma.hbm_to_vmem [thread:$0]  %s1, 13056, %s18, [#allocation3], 256, 256, 16
    $region9: #{simple_disc_forward.1} parent=1 // pred_fallthru
      _
    // Predicated region
    $region10: #{simple_disc_forward.1} parent=1 // pred_check
      _
    $region11: #{simple_disc_forward.1} parent=1 // pred_check_branch
      %25 = sbr.rel (0) target = $region13
    $region12: #{simple_disc_forward.1} parent=1 // pred_region
      %s27 = ssub.s32 12288, 12288
      %28 = vsyncadd [#allocation5], %s27
      %s29 = sshll.u32 [#allocation4], 4
      %s30 = int_to_ptr.vmem [resolvable:$true] %s29
      %35 = dma.hbm_to_vmem [thread:$0]  %s2, 12288, %s30, [#allocation5], 128, 128, 8
    $region13: #{simple_disc_forward.1} parent=1 // pred_fallthru
      _
    // Predicated region
    $region14: #{simple_disc_forward.1} parent=1 // pred_check
      _
    $region15: #{simple_disc_forward.1} parent=1 // pred_check_branch
      %37 = sbr.rel (0) target = $region17
    $region16: #{simple_disc_forward.1} parent=1 // pred_region
      %38 = dma.done [#allocation3], 13056
    $region17: #{simple_disc_forward.1} parent=1 // pred_fallthru
      _
    // Predicated region
    $region18: #{simple_disc_forward.1} parent=1 // pred_check
      _
    $region19: #{simple_disc_forward.1} parent=1 // pred_check_branch
      %40 = sbr.rel (0) target = $region21
    $region20: #{simple_disc_forward.1} parent=1 // pred_region
      %41 = dma.done [#allocation5], 12288
    $region21: #{simple_disc_forward.1} parent=1 // pred_fallthru
      _
    %v42 = vld [vmem:[#allocation2] sm:$0xff]
    %v43 = vld [vmem:[#allocation2 + $0x8] sm:$0xff]
    %v44 = vld [vmem:[%s0] sm:$0xff]
    %v45 = vld [vmem:[%s0 + $0x8] sm:$0xff]
    %v46 = vld [vmem:[%s0 + $0x10] sm:$0xff]
    %v47 = vld [vmem:[%s0 + $0x18] sm:$0xff]
    %v48 = vld [vmem:[#allocation2 + $0x10] sm:$0xff]
    %v49 = vld [vmem:[#allocation2 + $0x18] sm:$0xff]
    %v50 = vld [vmem:[#allocation2 + $0x20] sm:$0xff]
    %v51 = vld [vmem:[#allocation2 + $0x28] sm:$0xff]
    %v52 = vld [vmem:[#allocation2 + $0x30] sm:$0xff]
    %v53 = vld [vmem:[#allocation2 + $0x38] sm:$0xff]
    %v54 = vld [vmem:[#allocation2 + $0x40] sm:$0xff]
    %v55 = vld [vmem:[#allocation2 + $0x48] sm:$0xff]
    %v56 = vld [vmem:[#allocation2 + $0x50] sm:$0xff]
    %v57 = vld [vmem:[#allocation2 + $0x58] sm:$0xff]
    %v58 = vld [vmem:[#allocation2 + $0x60] sm:$0xff]
    %v59 = vld [vmem:[#allocation2 + $0x68] sm:$0xff]
    %v60 = vld [vmem:[#allocation2 + $0x70] sm:$0xff]
    %v61 = vld [vmem:[#allocation2 + $0x78] sm:$0xff]
    %v62 = vld [vmem:[#allocation2 + $0x80] sm:$0xff]
    %v63 = vld [vmem:[#allocation2 + $0x88] sm:$0xff]
    %v64 = vld [vmem:[#allocation2 + $0x90] sm:$0xff]
    %v65 = vld [vmem:[#allocation2 + $0x98] sm:$0xff]
    %v66 = vld [vmem:[#allocation2 + $0xa0] sm:$0xff]
    %v67 = vld [vmem:[#allocation2 + $0xa8] sm:$0xff]
    %v68 = vld [vmem:[#allocation2 + $0xb0] sm:$0xff]
    %v69 = vld [vmem:[#allocation2 + $0xb8] sm:$0xff]
    %v70 = vld [vmem:[#allocation2 + $0xc0] sm:$0xff]
    %v71 = vld [vmem:[#allocation2 + $0xc8] sm:$0xff]
    %v72 = vld [vmem:[#allocation2 + $0xd0] sm:$0xff]
    %v73 = vld [vmem:[#allocation2 + $0xd8] sm:$0xff]
    %v74 = vld [vmem:[#allocation2 + $0xe0] sm:$0xff]
    %v75 = vld [vmem:[#allocation2 + $0xe8] sm:$0xff]
    %v76 = vld [vmem:[#allocation2 + $0xf0] sm:$0xff]
    %v77 = vld [vmem:[#allocation2 + $0xf8] sm:$0xff]
    %v78 = vld [vmem:[#allocation2 + $0x100] sm:$0xff]
    %v79 = vld [vmem:[#allocation2 + $0x108] sm:$0xff]
    %v80 = vld [vmem:[#allocation2 + $0x110] sm:$0xff]
    %v81 = vld [vmem:[#allocation2 + $0x118] sm:$0xff]
    %v82 = vld [vmem:[#allocation2 + $0x120] sm:$0xff]
    %v83 = vld [vmem:[#allocation2 + $0x128] sm:$0xff]
    %v84 = vld [vmem:[#allocation2 + $0x130] sm:$0xff]
    %v85 = vld [vmem:[#allocation2 + $0x138] sm:$0xff]
    %v86 = vld [vmem:[#allocation2 + $0x140] sm:$0xff]
    %v87 = vld [vmem:[#allocation2 + $0x148] sm:$0xff]
    %v88 = vld [vmem:[#allocation2 + $0x150] sm:$0xff]
    %v89 = vld [vmem:[#allocation2 + $0x158] sm:$0xff]
    %v90 = vld [vmem:[#allocation2 + $0x160] sm:$0xff]
    %v91 = vld [vmem:[#allocation2 + $0x168] sm:$0xff]
    %v92 = vld [vmem:[#allocation2 + $0x170] sm:$0xff]
    %v93 = vld [vmem:[#allocation2 + $0x178] sm:$0xff]
    %v94 = vld [vmem:[#allocation2 + $0x180] sm:$0xff]
    %v95 = vld [vmem:[#allocation2 + $0x188] sm:$0xff]
    %v96 = vld [vmem:[#allocation2 + $0x190] sm:$0xff]
    %v97 = vld [vmem:[#allocation2 + $0x198] sm:$0xff]
    %v98 = vld [vmem:[#allocation2 + $0x1a0] sm:$0xff]
    %v99 = vld [vmem:[#allocation2 + $0x1a8] sm:$0xff]
    %v100 = vld [vmem:[#allocation2 + $0x1b0] sm:$0xff]
    %v101 = vld [vmem:[#allocation2 + $0x1b8] sm:$0xff]
    %v102 = vld [vmem:[#allocation2 + $0x1c0] sm:$0xff]
    %v103 = vld [vmem:[#allocation2 + $0x1c8] sm:$0xff]
    %v104 = vld [vmem:[#allocation2 + $0x1d0] sm:$0xff]
    %v105 = vld [vmem:[#allocation2 + $0x1d8] sm:$0xff]
    %v106 = vld [vmem:[#allocation2 + $0x1e0] sm:$0xff]
    %v107 = vld [vmem:[#allocation2 + $0x1e8] sm:$0xff]
    %v108 = vld [vmem:[#allocation2 + $0x1f0] sm:$0xff]
    %v109 = vld [vmem:[#allocation2 + $0x1f8] sm:$0xff]
    %v110 = vld [vmem:[#allocation2 + $0x200] sm:$0xff]
    %v111 = vld [vmem:[#allocation2 + $0x208] sm:$0xff]
    %v112 = vld [vmem:[#allocation2 + $0x210] sm:$0xff]
    %v113 = vld [vmem:[#allocation2 + $0x218] sm:$0xff]
    %v114 = vld [vmem:[#allocation2 + $0x220] sm:$0xff]
    %v115 = vld [vmem:[#allocation2 + $0x228] sm:$0xff]
    %v116 = vld [vmem:[#allocation2 + $0x230] sm:$0xff]
    %v117 = vld [vmem:[#allocation2 + $0x238] sm:$0xff]
    %v118 = vld [vmem:[#allocation2 + $0x240] sm:$0xff]
    %v119 = vld [vmem:[#allocation2 + $0x248] sm:$0xff]
    %v120 = vld [vmem:[#allocation2 + $0x250] sm:$0xff]
    %v121 = vld [vmem:[#allocation2 + $0x258] sm:$0xff]
    %v122 = vld [vmem:[#allocation2 + $0x260] sm:$0xff]
    %v123 = vld [vmem:[#allocation2 + $0x268] sm:$0xff]
    %v124 = vld [vmem:[#allocation2 + $0x270] sm:$0xff]
    %v125 = vld [vmem:[#allocation2 + $0x278] sm:$0xff]
    %v126 = vld [vmem:[#allocation2 + $0x280] sm:$0xff]
    %v127 = vld [vmem:[#allocation2 + $0x288] sm:$0xff]
    %v128 = vld [vmem:[#allocation2 + $0x290] sm:$0xff]
    %v129 = vld [vmem:[#allocation2 + $0x298] sm:$0xff]
    %v130 = vld [vmem:[#allocation2 + $0x2a0] sm:$0xff]
    %v131 = vld [vmem:[#allocation2 + $0x2a8] sm:$0xff]
    %v132 = vld [vmem:[#allocation2 + $0x2b0] sm:$0xff]
    %v133 = vld [vmem:[#allocation2 + $0x2b8] sm:$0xff]
    %v134 = vld [vmem:[#allocation2 + $0x2c0] sm:$0xff]
    %v135 = vld [vmem:[#allocation2 + $0x2c8] sm:$0xff]
    %v136 = vld [vmem:[#allocation2 + $0x2d0] sm:$0xff]
    %v137 = vld [vmem:[#allocation2 + $0x2d8] sm:$0xff]
    %v138 = vld [vmem:[#allocation2 + $0x2e0] sm:$0xff]
    %v139 = vld [vmem:[#allocation2 + $0x2e8] sm:$0xff]
    %v140 = vld [vmem:[#allocation2 + $0x2f0] sm:$0xff]
    %v141 = vld [vmem:[#allocation2 + $0x2f8] sm:$0xff]
    %v142 = vld [vmem:[#allocation2 + $0x300] sm:$0xff]
    %v143 = vld [vmem:[#allocation2 + $0x308] sm:$0xff]
    %v144 = vld [vmem:[#allocation2 + $0x310] sm:$0xff]
    %v145 = vld [vmem:[#allocation2 + $0x318] sm:$0xff]
    %v146 = vld [vmem:[#allocation2 + $0x320] sm:$0xff]
    %v147 = vld [vmem:[#allocation2 + $0x328] sm:$0xff]
    %v148 = vlaneseq
    %v149 = vshrl.u32 %v148, 7
    %v150 = vsub.s32 0, %v149
    %v151 = vrot.slane %v42, %v150
    %v152 = vlaneseq
    %v153 = vshrl.u32 %v152, 7
    %v154 = vsub.s32 0, %v153
    %v155 = vrot.slane %v43, %v154
    %vm156 = vcmask 130048
    %v158 = vsel %vm156, %v47, 0
    %160 = vmatprep.subr.mxu0 %v49
    %161 = vmatpush1.msra.mxu0 %v48
    %162 = vmatprep.subr.mxu0 %v51
    %163 = vmatpush1.msra.mxu0 %v50
    %164 = vmatprep.subr.mxu0 %v53
    %165 = vmatpush1.msra.mxu0 %v52
    %166 = vmatprep.subr.mxu0 %v55
    %167 = vmatpush1.msra.mxu0 %v54
    %168 = vmatprep.subr.mxu0 %v57
    %169 = vmatpush1.msra.mxu0 %v56
    %170 = vmatprep.subr.mxu0 %v59
    %171 = vmatpush1.msra.mxu0 %v58
    %172 = vmatprep.subr.mxu0 %v61
    %173 = vmatpush1.msra.mxu0 %v60
    %174 = vmatprep.subr.mxu0 %v63
    %175 = vmatpush1.msra.mxu0 %v62
    %176 = vmatprep.subr.mxu0 %v65
    %177 = vmatpush1.msra.mxu0 %v64
    %178 = vmatprep.subr.mxu0 %v67
    %179 = vmatpush1.msra.mxu0 %v66
    %180 = vmatprep.subr.mxu0 %v69
    %181 = vmatpush1.msra.mxu0 %v68
    %182 = vmatprep.subr.mxu0 %v71
    %183 = vmatpush1.msra.mxu0 %v70
    %184 = vmatprep.subr.mxu0 %v73
    %185 = vmatpush1.msra.mxu0 %v72
    %186 = vmatprep.subr.mxu0 %v75
    %187 = vmatpush1.msra.mxu0 %v74
    %188 = vmatprep.subr.mxu0 %v77
    %189 = vmatpush1.msra.mxu0 %v76
    %190 = vmatprep.subr.mxu0 %v79
    %191 = vmatpush1.msra.mxu0 %v78
    %192 = vmatprep.subr.mxu0 %v81
    %193 = vmatpush1.msra.mxu0 %v80
    %194 = vmatprep.subr.mxu0 %v83
    %195 = vmatpush1.msra.mxu0 %v82
    %196 = vmatprep.subr.mxu0 %v85
    %197 = vmatpush1.msra.mxu0 %v84
    %198 = vmatprep.subr.mxu0 %v87
    %199 = vmatpush1.msra.mxu0 %v86
    %200 = vmatprep.subr.mxu0 %v89
    %201 = vmatpush1.msra.mxu0 %v88
    %202 = vmatprep.subr.mxu0 %v91
    %203 = vmatpush1.msra.mxu0 %v90
    %204 = vmatprep.subr.mxu0 %v93
    %205 = vmatpush1.msra.mxu0 %v92
    %206 = vmatprep.subr.mxu0 %v95
    %207 = vmatpush1.msra.mxu0 %v94
    %208 = vmatprep.subr.mxu0 %v97
    %209 = vmatpush1.msra.mxu0 %v96
    %210 = vmatprep.subr.mxu0 %v99
    %211 = vmatpush1.msra.mxu0 %v98
    %212 = vmatprep.subr.mxu0 %v101
    %213 = vmatpush1.msra.mxu0 %v100
    %214 = vmatprep.subr.mxu0 %v103
    %215 = vmatpush1.msra.mxu0 %v102
    %216 = vmatprep.subr.mxu0 %v105
    %217 = vmatpush1.msra.mxu0 %v104
    %218 = vmatprep.subr.mxu0 %v107
    %219 = vmatpush1.msra.mxu0 %v106
    %220 = vmatprep.subr.mxu0 %v109
    %221 = vmatpush1.msra.mxu0 %v108
    %222 = vmatprep.subr.mxu0 %v111
    %223 = vmatpush1.msra.mxu0 %v110
    %224 = vmatprep.mubr.f32.mxu0 %v45
    %225 = vmatmul.mubr.f32.gmra.mrb[0].mxu0 %v44
    %v226 = vpop.f32.mrb[0].mxu0
    %v227 = vadd.f32 %v151, %v226
    %v228 = vpop.f32.mrb[0].mxu0
    %v229 = vadd.f32 %v155, %v228
    %230 = vdwg.mxu0
    %231 = vmatprep.subr.mxu0 %v113
    %232 = vmatpush1.msra.mxu0 %v112
    %233 = vmatprep.subr.mxu0 %v115
    %234 = vmatpush1.msra.mxu0 %v114
    %235 = vmatprep.subr.mxu0 %v117
    %236 = vmatpush1.msra.mxu0 %v116
    %237 = vmatprep.subr.mxu0 %v119
    %238 = vmatpush1.msra.mxu0 %v118
    %239 = vmatprep.subr.mxu0 %v121
    %240 = vmatpush1.msra.mxu0 %v120
    %241 = vmatprep.subr.mxu0 %v123
    %242 = vmatpush1.msra.mxu0 %v122
    %243 = vmatprep.subr.mxu0 %v125
    %244 = vmatpush1.msra.mxu0 %v124
    %245 = vmatprep.subr.mxu0 %v127
    %246 = vmatpush1.msra.mxu0 %v126
    %247 = vmatprep.subr.mxu0 %v129
    %248 = vmatpush1.msra.mxu0 %v128
    %249 = vmatprep.subr.mxu0 %v131
    %250 = vmatpush1.msra.mxu0 %v130
    %251 = vmatprep.subr.mxu0 %v133
    %252 = vmatpush1.msra.mxu0 %v132
    %253 = vmatprep.subr.mxu0 %v135
    %254 = vmatpush1.msra.mxu0 %v134
    %255 = vmatprep.subr.mxu0 %v137
    %256 = vmatpush1.msra.mxu0 %v136
    %257 = vmatprep.subr.mxu0 %v139
    %258 = vmatpush1.msra.mxu0 %v138
    %259 = vmatprep.subr.mxu0 %v141
    %260 = vmatpush1.msra.mxu0 %v140
    %261 = vmatprep.subr.mxu0 %v143
    %262 = vmatpush1.msra.mxu0 %v142
    %263 = vmatprep.subr.mxu0 %v145
    %264 = vmatpush1.msra.mxu0 %v144
    %265 = vmatprep.subr.mxu0 %v147
    %266 = vmatpush1.msra.mxu0 %v146
    %267 = vmatprep.subr.mxu0 0.0
    %268 = vmatpush1.msra.mxu0 0.0
    %269 = vmatprep.subr.mxu0 0.0
    %270 = vmatpush1.msra.mxu0 0.0
    %271 = vmatprep.subr.mxu0 0.0
    %272 = vmatpush1.msra.mxu0 0.0
    %273 = vmatprep.subr.mxu0 0.0
    %274 = vmatpush1.msra.mxu0 0.0
    %275 = vmatprep.subr.mxu0 0.0
    %276 = vmatpush1.msra.mxu0 0.0
    %277 = vmatprep.subr.mxu0 0.0
    %278 = vmatpush1.msra.mxu0 0.0
    %279 = vmatprep.subr.mxu0 0.0
    %280 = vmatpush1.msra.mxu0 0.0
    %281 = vmatprep.subr.mxu0 0.0
    %282 = vmatpush1.msra.mxu0 0.0
    %283 = vmatprep.subr.mxu0 0.0
    %284 = vmatpush1.msra.mxu0 0.0
    %285 = vmatprep.subr.mxu0 0.0
    %286 = vmatpush1.msra.mxu0 0.0
    %287 = vmatprep.subr.mxu0 0.0
    %288 = vmatpush1.msra.mxu0 0.0
    %289 = vmatprep.subr.mxu0 0.0
    %290 = vmatpush1.msra.mxu0 0.0
    %291 = vmatprep.subr.mxu0 0.0
    %292 = vmatpush1.msra.mxu0 0.0
    %293 = vmatprep.subr.mxu0 0.0
    %294 = vmatpush1.msra.mxu0 0.0
    %295 = vmatprep.mubr.f32.mxu0 %v158
    %296 = vmatmul.mubr.f32.gmra.mrb[0].mxu0 %v46
    %v297 = vpop.f32.mrb[0].mxu0
    %v298 = vadd.f32 %v227, %v297
    %v299 = vpop.f32.mrb[0].mxu0
    %v300 = vadd.f32 %v229, %v299
    %301 = vdwg.mxu0
    %v302 = vmax.f32 %v298, 0.0
    %v303 = vmax.f32 %v300, 0.0
    %v304 = vld [vmem:[#allocation4] sm:$0xff]
    %v305 = vld [vmem:[#allocation4 + $0x8] sm:$0xff]
    %v306 = vld [vmem:[#allocation4 + $0x10] sm:$0xff]
    %v307 = vld [vmem:[#allocation4 + $0x18] sm:$0xff]
    %v308 = vld [vmem:[#allocation4 + $0x20] sm:$0xff]
    %v309 = vld [vmem:[#allocation4 + $0x28] sm:$0xff]
    %v310 = vld [vmem:[#allocation4 + $0x30] sm:$0xff]
    %v311 = vld [vmem:[#allocation4 + $0x38] sm:$0xff]
    %v312 = vld [vmem:[#allocation4 + $0x40] sm:$0xff]
    %v313 = vld [vmem:[#allocation4 + $0x48] sm:$0xff]
    %v314 = vld [vmem:[#allocation4 + $0x50] sm:$0xff]
    %v315 = vld [vmem:[#allocation4 + $0x58] sm:$0xff]
    %v316 = vld [vmem:[#allocation4 + $0x60] sm:$0xff]
    %v317 = vld [vmem:[#allocation4 + $0x68] sm:$0xff]
    %v318 = vld [vmem:[#allocation4 + $0x70] sm:$0xff]
    %v319 = vld [vmem:[#allocation4 + $0x78] sm:$0xff]
    %v320 = vld [vmem:[#allocation4 + $0x80] sm:$0xff]
    %v321 = vld [vmem:[#allocation4 + $0x88] sm:$0xff]
    %v322 = vld [vmem:[#allocation4 + $0x90] sm:$0xff]
    %v323 = vld [vmem:[#allocation4 + $0x98] sm:$0xff]
    %v324 = vld [vmem:[#allocation4 + $0xa0] sm:$0xff]
    %v325 = vld [vmem:[#allocation4 + $0xa8] sm:$0xff]
    %v326 = vld [vmem:[#allocation4 + $0xb0] sm:$0xff]
    %v327 = vld [vmem:[#allocation4 + $0xb8] sm:$0xff]
    %v328 = vld [vmem:[#allocation4 + $0xc0] sm:$0xff]
    %v329 = vld [vmem:[#allocation4 + $0xc8] sm:$0xff]
    %v330 = vld [vmem:[#allocation4 + $0xd0] sm:$0xff]
    %v331 = vld [vmem:[#allocation4 + $0xd8] sm:$0xff]
    %v332 = vld [vmem:[#allocation4 + $0xe0] sm:$0xff]
    %v333 = vld [vmem:[#allocation4 + $0xe8] sm:$0xff]
    %v334 = vld [vmem:[#allocation4 + $0xf0] sm:$0xff]
    %v335 = vld [vmem:[#allocation4 + $0xf8] sm:$0xff]
    %v336 = vlaneseq
    %v337 = vshrl.u32 %v336, 7
    %v338 = vsub.s32 1, %v337
    %v339 = vrot.slane %v42, %v338
    %340 = vmatprep.subr.mxu0 0.0
    %341 = vmatpush1.msra.mxu0 %v304
    %342 = vmatprep.subr.mxu0 0.0
    %343 = vmatpush1.msra.mxu0 %v305
    %344 = vmatprep.subr.mxu0 0.0
    %345 = vmatpush1.msra.mxu0 %v306
    %346 = vmatprep.subr.mxu0 0.0
    %347 = vmatpush1.msra.mxu0 %v307
    %348 = vmatprep.subr.mxu0 0.0
    %349 = vmatpush1.msra.mxu0 %v308
    %350 = vmatprep.subr.mxu0 0.0
    %351 = vmatpush1.msra.mxu0 %v309
    %352 = vmatprep.subr.mxu0 0.0
    %353 = vmatpush1.msra.mxu0 %v310
    %354 = vmatprep.subr.mxu0 0.0
    %355 = vmatpush1.msra.mxu0 %v311
    %356 = vmatprep.subr.mxu0 0.0
    %357 = vmatpush1.msra.mxu0 %v312
    %358 = vmatprep.subr.mxu0 0.0
    %359 = vmatpush1.msra.mxu0 %v313
    %360 = vmatprep.subr.mxu0 0.0
    %361 = vmatpush1.msra.mxu0 %v314
    %362 = vmatprep.subr.mxu0 0.0
    %363 = vmatpush1.msra.mxu0 %v315
    %364 = vmatprep.subr.mxu0 0.0
    %365 = vmatpush1.msra.mxu0 %v316
    %366 = vmatprep.subr.mxu0 0.0
    %367 = vmatpush1.msra.mxu0 %v317
    %368 = vmatprep.subr.mxu0 0.0
    %369 = vmatpush1.msra.mxu0 %v318
    %370 = vmatprep.subr.mxu0 0.0
    %371 = vmatpush1.msra.mxu0 %v319
    %372 = vmatprep.subr.mxu0 0.0
    %373 = vmatpush1.msra.mxu0 %v320
    %374 = vmatprep.subr.mxu0 0.0
    %375 = vmatpush1.msra.mxu0 %v321
    %376 = vmatprep.subr.mxu0 0.0
    %377 = vmatpush1.msra.mxu0 %v322
    %378 = vmatprep.subr.mxu0 0.0
    %379 = vmatpush1.msra.mxu0 %v323
    %380 = vmatprep.subr.mxu0 0.0
    %381 = vmatpush1.msra.mxu0 %v324
    %382 = vmatprep.subr.mxu0 0.0
    %383 = vmatpush1.msra.mxu0 %v325
    %384 = vmatprep.subr.mxu0 0.0
    %385 = vmatpush1.msra.mxu0 %v326
    %386 = vmatprep.subr.mxu0 0.0
    %387 = vmatpush1.msra.mxu0 %v327
    %388 = vmatprep.subr.mxu0 0.0
    %389 = vmatpush1.msra.mxu0 %v328
    %390 = vmatprep.subr.mxu0 0.0
    %391 = vmatpush1.msra.mxu0 %v329
    %392 = vmatprep.subr.mxu0 0.0
    %393 = vmatpush1.msra.mxu0 %v330
    %394 = vmatprep.subr.mxu0 0.0
    %395 = vmatpush1.msra.mxu0 %v331
    %396 = vmatprep.subr.mxu0 0.0
    %397 = vmatpush1.msra.mxu0 %v332
    %398 = vmatprep.subr.mxu0 0.0
    %399 = vmatpush1.msra.mxu0 %v333
    %400 = vmatprep.subr.mxu0 0.0
    %401 = vmatpush1.msra.mxu0 %v334
    %402 = vmatprep.subr.mxu0 0.0
    %403 = vmatpush1.msra.mxu0 %v335
    %404 = vmatprep.mubr.f32.mxu0 %v303
    %405 = vmatmul.mubr.f32.gmra.mrb[0].mxu0 %v302
    %v406 = vpop.f32.mrb[0].mxu0
    %v407 = vadd.f32 %v339, %v406
    %v408 = vpop.f32.mrb[0].mxu0
    %409 = vdwg.mxu0
    %v410 = vmax.f32 %v407, 0.0
    %v411 = vld [vmem:[#allocation4 + $0x100] sm:$0xff]
    %v412 = vld [vmem:[#allocation4 + $0x108] sm:$0xff]
    %v413 = vld [vmem:[#allocation4 + $0x110] sm:$0xff]
    %v414 = vld [vmem:[#allocation4 + $0x118] sm:$0xff]
    %v415 = vld [vmem:[#allocation4 + $0x120] sm:$0xff]
    %v416 = vld [vmem:[#allocation4 + $0x128] sm:$0xff]
    %v417 = vld [vmem:[#allocation4 + $0x130] sm:$0xff]
    %v418 = vld [vmem:[#allocation4 + $0x138] sm:$0xff]
    %v419 = vld [vmem:[#allocation4 + $0x140] sm:$0xff]
    %v420 = vld [vmem:[#allocation4 + $0x148] sm:$0xff]
    %v421 = vld [vmem:[#allocation4 + $0x150] sm:$0xff]
    %v422 = vld [vmem:[#allocation4 + $0x158] sm:$0xff]
    %v423 = vld [vmem:[#allocation4 + $0x160] sm:$0xff]
    %v424 = vld [vmem:[#allocation4 + $0x168] sm:$0xff]
    %v425 = vld [vmem:[#allocation4 + $0x170] sm:$0xff]
    %v426 = vld [vmem:[#allocation4 + $0x178] sm:$0xff]
    %v427 = vlaneseq
    %v428 = vshrl.u32 %v427, 7
    %v429 = vsub.s32 2, %v428
    %v430 = vrot.slane %v42, %v429
    %431 = vmatprep.subr.mxu0 0.0
    %432 = vmatpush1.msra.mxu0 %v411
    %433 = vmatprep.subr.mxu0 0.0
    %434 = vmatpush1.msra.mxu0 %v412
    %435 = vmatprep.subr.mxu0 0.0
    %436 = vmatpush1.msra.mxu0 %v413
    %437 = vmatprep.subr.mxu0 0.0
    %438 = vmatpush1.msra.mxu0 %v414
    %439 = vmatprep.subr.mxu0 0.0
    %440 = vmatpush1.msra.mxu0 %v415
    %441 = vmatprep.subr.mxu0 0.0
    %442 = vmatpush1.msra.mxu0 %v416
    %443 = vmatprep.subr.mxu0 0.0
    %444 = vmatpush1.msra.mxu0 %v417
    %445 = vmatprep.subr.mxu0 0.0
    %446 = vmatpush1.msra.mxu0 %v418
    %447 = vmatprep.subr.mxu0 0.0
    %448 = vmatpush1.msra.mxu0 %v419
    %449 = vmatprep.subr.mxu0 0.0
    %450 = vmatpush1.msra.mxu0 %v420
    %451 = vmatprep.subr.mxu0 0.0
    %452 = vmatpush1.msra.mxu0 %v421
    %453 = vmatprep.subr.mxu0 0.0
    %454 = vmatpush1.msra.mxu0 %v422
    %455 = vmatprep.subr.mxu0 0.0
    %456 = vmatpush1.msra.mxu0 %v423
    %457 = vmatprep.subr.mxu0 0.0
    %458 = vmatpush1.msra.mxu0 %v424
    %459 = vmatprep.subr.mxu0 0.0
    %460 = vmatpush1.msra.mxu0 %v425
    %461 = vmatprep.subr.mxu0 0.0
    %462 = vmatpush1.msra.mxu0 %v426
    %463 = vmatprep.subr.mxu0 0.0
    %464 = vmatpush1.msra.mxu0 0.0
    %465 = vmatprep.subr.mxu0 0.0
    %466 = vmatpush1.msra.mxu0 0.0
    %467 = vmatprep.subr.mxu0 0.0
    %468 = vmatpush1.msra.mxu0 0.0
    %469 = vmatprep.subr.mxu0 0.0
    %470 = vmatpush1.msra.mxu0 0.0
    %471 = vmatprep.subr.mxu0 0.0
    %472 = vmatpush1.msra.mxu0 0.0
    %473 = vmatprep.subr.mxu0 0.0
    %474 = vmatpush1.msra.mxu0 0.0
    %475 = vmatprep.subr.mxu0 0.0
    %476 = vmatpush1.msra.mxu0 0.0
    %477 = vmatprep.subr.mxu0 0.0
    %478 = vmatpush1.msra.mxu0 0.0
    %479 = vmatprep.subr.mxu0 0.0
    %480 = vmatpush1.msra.mxu0 0.0
    %481 = vmatprep.subr.mxu0 0.0
    %482 = vmatpush1.msra.mxu0 0.0
    %483 = vmatprep.subr.mxu0 0.0
    %484 = vmatpush1.msra.mxu0 0.0
    %485 = vmatprep.subr.mxu0 0.0
    %486 = vmatpush1.msra.mxu0 0.0
    %487 = vmatprep.subr.mxu0 0.0
    %488 = vmatpush1.msra.mxu0 0.0
    %489 = vmatprep.subr.mxu0 0.0
    %490 = vmatpush1.msra.mxu0 0.0
    %491 = vmatprep.subr.mxu0 0.0
    %492 = vmatpush1.msra.mxu0 0.0
    %493 = vmatprep.subr.mxu0 0.0
    %494 = vmatpush1.msra.mxu0 0.0
    %495 = vmatprep.mubr.f32.mxu0 0.0
    %496 = vmatmul.mubr.f32.gmra.mrb[0].mxu0 %v410
    %v497 = vpop.f32.mrb[0].mxu0
    %v498 = vadd.f32 %v430, %v497
    %v499 = vpop.f32.mrb[0].mxu0
    %500 = vdwg.mxu0
    %v501 = vmax.f32 %v498, 0.0
    %v502 = vld [vmem:[#allocation4 + $0x180] sm:$0xff]
    %v503 = vld [vmem:[#allocation4 + $0x188] sm:$0xff]
    %v504 = vld [vmem:[#allocation4 + $0x190] sm:$0xff]
    %v505 = vld [vmem:[#allocation4 + $0x198] sm:$0xff]
    %v506 = vld [vmem:[#allocation4 + $0x1a0] sm:$0xff]
    %v507 = vld [vmem:[#allocation4 + $0x1a8] sm:$0xff]
    %v508 = vld [vmem:[#allocation4 + $0x1b0] sm:$0xff]
    %v509 = vld [vmem:[#allocation4 + $0x1b8] sm:$0xff]
    %v510 = vld [vmem:[#allocation4 + $0x1c0] sm:$0xff]
    %v511 = vld [vmem:[#allocation4 + $0x1c8] sm:$0xff]
    %v512 = vld [vmem:[#allocation4 + $0x1d0] sm:$0xff]
    %v513 = vld [vmem:[#allocation4 + $0x1d8] sm:$0xff]
    %v514 = vld [vmem:[#allocation4 + $0x1e0] sm:$0xff]
    %v515 = vld [vmem:[#allocation4 + $0x1e8] sm:$0xff]
    %v516 = vld [vmem:[#allocation4 + $0x1f0] sm:$0xff]
    %v517 = vld [vmem:[#allocation4 + $0x1f8] sm:$0xff]
    %v518 = vlaneseq
    %v519 = vshrl.u32 %v518, 7
    %v520 = vsub.s32 3, %v519
    %v521 = vrot.slane %v42, %v520
    %522 = vmatprep.subr.mxu0 0.0
    %523 = vmatpush1.msra.mxu0 %v502
    %524 = vmatprep.subr.mxu0 0.0
    %525 = vmatpush1.msra.mxu0 %v503
    %526 = vmatprep.subr.mxu0 0.0
    %527 = vmatpush1.msra.mxu0 %v504
    %528 = vmatprep.subr.mxu0 0.0
    %529 = vmatpush1.msra.mxu0 %v505
    %530 = vmatprep.subr.mxu0 0.0
    %531 = vmatpush1.msra.mxu0 %v506
    %532 = vmatprep.subr.mxu0 0.0
    %533 = vmatpush1.msra.mxu0 %v507
    %534 = vmatprep.subr.mxu0 0.0
    %535 = vmatpush1.msra.mxu0 %v508
    %536 = vmatprep.subr.mxu0 0.0
    %537 = vmatpush1.msra.mxu0 %v509
    %538 = vmatprep.subr.mxu0 0.0
    %539 = vmatpush1.msra.mxu0 %v510
    %540 = vmatprep.subr.mxu0 0.0
    %541 = vmatpush1.msra.mxu0 %v511
    %542 = vmatprep.subr.mxu0 0.0
    %543 = vmatpush1.msra.mxu0 %v512
    %544 = vmatprep.subr.mxu0 0.0
    %545 = vmatpush1.msra.mxu0 %v513
    %546 = vmatprep.subr.mxu0 0.0
    %547 = vmatpush1.msra.mxu0 %v514
    %548 = vmatprep.subr.mxu0 0.0
    %549 = vmatpush1.msra.mxu0 %v515
    %550 = vmatprep.subr.mxu0 0.0
    %551 = vmatpush1.msra.mxu0 %v516
    %552 = vmatprep.subr.mxu0 0.0
    %553 = vmatpush1.msra.mxu0 %v517
    %554 = vmatprep.subr.mxu0 0.0
    %555 = vmatpush1.msra.mxu0 0.0
    %556 = vmatprep.subr.mxu0 0.0
    %557 = vmatpush1.msra.mxu0 0.0
    %558 = vmatprep.subr.mxu0 0.0
    %559 = vmatpush1.msra.mxu0 0.0
    %560 = vmatprep.subr.mxu0 0.0
    %561 = vmatpush1.msra.mxu0 0.0
    %562 = vmatprep.subr.mxu0 0.0
    %563 = vmatpush1.msra.mxu0 0.0
    %564 = vmatprep.subr.mxu0 0.0
    %565 = vmatpush1.msra.mxu0 0.0
    %566 = vmatprep.subr.mxu0 0.0
    %567 = vmatpush1.msra.mxu0 0.0
    %568 = vmatprep.subr.mxu0 0.0
    %569 = vmatpush1.msra.mxu0 0.0
    %570 = vmatprep.subr.mxu0 0.0
    %571 = vmatpush1.msra.mxu0 0.0
    %572 = vmatprep.subr.mxu0 0.0
    %573 = vmatpush1.msra.mxu0 0.0
    %574 = vmatprep.subr.mxu0 0.0
    %575 = vmatpush1.msra.mxu0 0.0
    %576 = vmatprep.subr.mxu0 0.0
    %577 = vmatpush1.msra.mxu0 0.0
    %578 = vmatprep.subr.mxu0 0.0
    %579 = vmatpush1.msra.mxu0 0.0
    %580 = vmatprep.subr.mxu0 0.0
    %581 = vmatpush1.msra.mxu0 0.0
    %582 = vmatprep.subr.mxu0 0.0
    %583 = vmatpush1.msra.mxu0 0.0
    %584 = vmatprep.subr.mxu0 0.0
    %585 = vmatpush1.msra.mxu0 0.0
    %586 = vmatprep.mubr.f32.mxu0 0.0
    %587 = vmatmul.mubr.f32.gmra.mrb[0].mxu0 %v501
    %v588 = vpop.f32.mrb[0].mxu0
    %v589 = vadd.f32 %v521, %v588
    %v590 = vpop.f32.mrb[0].mxu0
    %591 = vdwg.mxu0
    %v592 = vmax.f32 %v589, 0.0
    %v593 = vld [vmem:[#allocation4 + $0x200] sm:$0xff]
    %v594 = vld [vmem:[#allocation4 + $0x208] sm:$0xff]
    %v595 = vld [vmem:[#allocation4 + $0x210] sm:$0xff]
    %v596 = vld [vmem:[#allocation4 + $0x218] sm:$0xff]
    %v597 = vld [vmem:[#allocation4 + $0x220] sm:$0xff]
    %v598 = vld [vmem:[#allocation4 + $0x228] sm:$0xff]
    %v599 = vld [vmem:[#allocation4 + $0x230] sm:$0xff]
    %v600 = vld [vmem:[#allocation4 + $0x238] sm:$0xff]
    %v601 = vld [vmem:[#allocation4 + $0x240] sm:$0xff]
    %v602 = vld [vmem:[#allocation4 + $0x248] sm:$0xff]
    %v603 = vld [vmem:[#allocation4 + $0x250] sm:$0xff]
    %v604 = vld [vmem:[#allocation4 + $0x258] sm:$0xff]
    %v605 = vld [vmem:[#allocation4 + $0x260] sm:$0xff]
    %v606 = vld [vmem:[#allocation4 + $0x268] sm:$0xff]
    %v607 = vld [vmem:[#allocation4 + $0x270] sm:$0xff]
    %v608 = vld [vmem:[#allocation4 + $0x278] sm:$0xff]
    %v609 = vlaneseq
    %v610 = vshrl.u32 %v609, 7
    %v611 = vsub.s32 4, %v610
    %v612 = vrot.slane %v42, %v611
    %613 = vmatprep.subr.mxu0 0.0
    %614 = vmatpush1.msra.mxu0 %v593
    %615 = vmatprep.subr.mxu0 0.0
    %616 = vmatpush1.msra.mxu0 %v594
    %617 = vmatprep.subr.mxu0 0.0
    %618 = vmatpush1.msra.mxu0 %v595
    %619 = vmatprep.subr.mxu0 0.0
    %620 = vmatpush1.msra.mxu0 %v596
    %621 = vmatprep.subr.mxu0 0.0
    %622 = vmatpush1.msra.mxu0 %v597
    %623 = vmatprep.subr.mxu0 0.0
    %624 = vmatpush1.msra.mxu0 %v598
    %625 = vmatprep.subr.mxu0 0.0
    %626 = vmatpush1.msra.mxu0 %v599
    %627 = vmatprep.subr.mxu0 0.0
    %628 = vmatpush1.msra.mxu0 %v600
    %629 = vmatprep.subr.mxu0 0.0
    %630 = vmatpush1.msra.mxu0 %v601
    %631 = vmatprep.subr.mxu0 0.0
    %632 = vmatpush1.msra.mxu0 %v602
    %633 = vmatprep.subr.mxu0 0.0
    %634 = vmatpush1.msra.mxu0 %v603
    %635 = vmatprep.subr.mxu0 0.0
    %636 = vmatpush1.msra.mxu0 %v604
    %637 = vmatprep.subr.mxu0 0.0
    %638 = vmatpush1.msra.mxu0 %v605
    %639 = vmatprep.subr.mxu0 0.0
    %640 = vmatpush1.msra.mxu0 %v606
    %641 = vmatprep.subr.mxu0 0.0
    %642 = vmatpush1.msra.mxu0 %v607
    %643 = vmatprep.subr.mxu0 0.0
    %644 = vmatpush1.msra.mxu0 %v608
    %645 = vmatprep.subr.mxu0 0.0
    %646 = vmatpush1.msra.mxu0 0.0
    %647 = vmatprep.subr.mxu0 0.0
    %648 = vmatpush1.msra.mxu0 0.0
    %649 = vmatprep.subr.mxu0 0.0
    %650 = vmatpush1.msra.mxu0 0.0
    %651 = vmatprep.subr.mxu0 0.0
    %652 = vmatpush1.msra.mxu0 0.0
    %653 = vmatprep.subr.mxu0 0.0
    %654 = vmatpush1.msra.mxu0 0.0
    %655 = vmatprep.subr.mxu0 0.0
    %656 = vmatpush1.msra.mxu0 0.0
    %657 = vmatprep.subr.mxu0 0.0
    %658 = vmatpush1.msra.mxu0 0.0
    %659 = vmatprep.subr.mxu0 0.0
    %660 = vmatpush1.msra.mxu0 0.0
    %661 = vmatprep.subr.mxu0 0.0
    %662 = vmatpush1.msra.mxu0 0.0
    %663 = vmatprep.subr.mxu0 0.0
    %664 = vmatpush1.msra.mxu0 0.0
    %665 = vmatprep.subr.mxu0 0.0
    %666 = vmatpush1.msra.mxu0 0.0
    %667 = vmatprep.subr.mxu0 0.0
    %668 = vmatpush1.msra.mxu0 0.0
    %669 = vmatprep.subr.mxu0 0.0
    %670 = vmatpush1.msra.mxu0 0.0
    %671 = vmatprep.subr.mxu0 0.0
    %672 = vmatpush1.msra.mxu0 0.0
    %673 = vmatprep.subr.mxu0 0.0
    %674 = vmatpush1.msra.mxu0 0.0
    %675 = vmatprep.subr.mxu0 0.0
    %676 = vmatpush1.msra.mxu0 0.0
    %677 = vmatprep.mubr.f32.mxu0 0.0
    %678 = vmatmul.mubr.f32.gmra.mrb[0].mxu0 %v592
    %v679 = vpop.f32.mrb[0].mxu0
    %v680 = vadd.f32 %v612, %v679
    %v681 = vpop.f32.mrb[0].mxu0
    %682 = vdwg.mxu0
    %v683 = vmax.f32 %v680, 0.0
    %v684 = vld [vmem:[#allocation4 + $0x280] sm:$0xff]
    %v685 = vld [vmem:[#allocation4 + $0x288] sm:$0xff]
    %v686 = vld [vmem:[#allocation4 + $0x290] sm:$0xff]
    %v687 = vld [vmem:[#allocation4 + $0x298] sm:$0xff]
    %v688 = vld [vmem:[#allocation4 + $0x2a0] sm:$0xff]
    %v689 = vld [vmem:[#allocation4 + $0x2a8] sm:$0xff]
    %v690 = vld [vmem:[#allocation4 + $0x2b0] sm:$0xff]
    %v691 = vld [vmem:[#allocation4 + $0x2b8] sm:$0xff]
    %v692 = vld [vmem:[#allocation4 + $0x2c0] sm:$0xff]
    %v693 = vld [vmem:[#allocation4 + $0x2c8] sm:$0xff]
    %v694 = vld [vmem:[#allocation4 + $0x2d0] sm:$0xff]
    %v695 = vld [vmem:[#allocation4 + $0x2d8] sm:$0xff]
    %v696 = vld [vmem:[#allocation4 + $0x2e0] sm:$0xff]
    %v697 = vld [vmem:[#allocation4 + $0x2e8] sm:$0xff]
    %v698 = vld [vmem:[#allocation4 + $0x2f0] sm:$0xff]
    %v699 = vld [vmem:[#allocation4 + $0x2f8] sm:$0xff]
    %v700 = vlaneseq
    %v701 = vshrl.u32 %v700, 7
    %v702 = vsub.s32 5, %v701
    %v703 = vrot.slane %v42, %v702
    %704 = vmatprep.subr.mxu0 0.0
    %705 = vmatpush1.msra.mxu0 %v684
    %706 = vmatprep.subr.mxu0 0.0
    %707 = vmatpush1.msra.mxu0 %v685
    %708 = vmatprep.subr.mxu0 0.0
    %709 = vmatpush1.msra.mxu0 %v686
    %710 = vmatprep.subr.mxu0 0.0
    %711 = vmatpush1.msra.mxu0 %v687
    %712 = vmatprep.subr.mxu0 0.0
    %713 = vmatpush1.msra.mxu0 %v688
    %714 = vmatprep.subr.mxu0 0.0
    %715 = vmatpush1.msra.mxu0 %v689
    %716 = vmatprep.subr.mxu0 0.0
    %717 = vmatpush1.msra.mxu0 %v690
    %718 = vmatprep.subr.mxu0 0.0
    %719 = vmatpush1.msra.mxu0 %v691
    %720 = vmatprep.subr.mxu0 0.0
    %721 = vmatpush1.msra.mxu0 %v692
    %722 = vmatprep.subr.mxu0 0.0
    %723 = vmatpush1.msra.mxu0 %v693
    %724 = vmatprep.subr.mxu0 0.0
    %725 = vmatpush1.msra.mxu0 %v694
    %726 = vmatprep.subr.mxu0 0.0
    %727 = vmatpush1.msra.mxu0 %v695
    %728 = vmatprep.subr.mxu0 0.0
    %729 = vmatpush1.msra.mxu0 %v696
    %730 = vmatprep.subr.mxu0 0.0
    %731 = vmatpush1.msra.mxu0 %v697
    %732 = vmatprep.subr.mxu0 0.0
    %733 = vmatpush1.msra.mxu0 %v698
    %734 = vmatprep.subr.mxu0 0.0
    %735 = vmatpush1.msra.mxu0 %v699
    %736 = vmatprep.subr.mxu0 0.0
    %737 = vmatpush1.msra.mxu0 0.0
    %738 = vmatprep.subr.mxu0 0.0
    %739 = vmatpush1.msra.mxu0 0.0
    %740 = vmatprep.subr.mxu0 0.0
    %741 = vmatpush1.msra.mxu0 0.0
    %742 = vmatprep.subr.mxu0 0.0
    %743 = vmatpush1.msra.mxu0 0.0
    %744 = vmatprep.subr.mxu0 0.0
    %745 = vmatpush1.msra.mxu0 0.0
    %746 = vmatprep.subr.mxu0 0.0
    %747 = vmatpush1.msra.mxu0 0.0
    %748 = vmatprep.subr.mxu0 0.0
    %749 = vmatpush1.msra.mxu0 0.0
    %750 = vmatprep.subr.mxu0 0.0
    %751 = vmatpush1.msra.mxu0 0.0
    %752 = vmatprep.subr.mxu0 0.0
    %753 = vmatpush1.msra.mxu0 0.0
    %754 = vmatprep.subr.mxu0 0.0
    %755 = vmatpush1.msra.mxu0 0.0
    %756 = vmatprep.subr.mxu0 0.0
    %757 = vmatpush1.msra.mxu0 0.0
    %758 = vmatprep.subr.mxu0 0.0
    %759 = vmatpush1.msra.mxu0 0.0
    %760 = vmatprep.subr.mxu0 0.0
    %761 = vmatpush1.msra.mxu0 0.0
    %762 = vmatprep.subr.mxu0 0.0
    %763 = vmatpush1.msra.mxu0 0.0
    %764 = vmatprep.subr.mxu0 0.0
    %765 = vmatpush1.msra.mxu0 0.0
    %766 = vmatprep.subr.mxu0 0.0
    %767 = vmatpush1.msra.mxu0 0.0
    %768 = vmatprep.mubr.f32.mxu0 0.0
    %769 = vmatmul.mubr.f32.gmra.mrb[0].mxu0 %v683
    %v770 = vpop.f32.mrb[0].mxu0
    %v771 = vadd.f32 %v703, %v770
    %v772 = vpop.f32.mrb[0].mxu0
    %773 = vdwg.mxu0
    %774 = vst [vmem:[%s3] sm:$0xff] %v771
    // Predicated region
    $region22: #{simple_disc_forward.1} parent=1 // pred_check
      _
    $region23: #{simple_disc_forward.1} parent=1 // pred_check_branch
      %776 = sbr.rel (0) target = $region25
    $region24: #{simple_disc_forward.1} parent=1 // pred_region
      _
    $region25: #{simple_disc_forward.1} parent=1 // pred_fallthru
      _
    // Predicated region
    $region26: #{simple_disc_forward.1} parent=1 // pred_check
      _
    $region27: #{simple_disc_forward.1} parent=1 // pred_check_branch
      %778 = sbr.rel (0) target = $region29
    $region28: #{simple_disc_forward.1} parent=1 // pred_region
      _
    $region29: #{simple_disc_forward.1} parent=1 // pred_fallthru
      _
    %779 = vsyncpa [#allocation3], 1
    %780 = vsyncpa [#allocation5], 1

</llo_original>
